<compile_context>
chip_gen: v7x
topology: tpu7x:2x2x1
jax: 0.10.0
libtpu: 0.0.40
codegen_flags: <defaults>
</compile_context>

<pallas_src>
import jax
import jax.numpy as jnp
from jax.experimental import pallas as pl
from jax.experimental.pallas import tpu as pltpu

_LANE = 128
_SUBLANE = 8


def _cdiv(a: int, b: int) -> int:
    return -(-a // b)


def _round_up(a: int, b: int) -> int:
    return _cdiv(a, b) * b


def _softmax_mask_kernel(x_ref, o_ref):
    # x_ref block: (1, C, T, 128) ; o_ref block: (1, T, 128)
    C = x_ref.shape[1]

    # Pass 1: running max over channels -- streamed elementwise VPU max over C (T,128)
    # planes; no (C, T, 128) f32 temporary is ever materialized.
    m = x_ref[0, 0].astype(jnp.float32)
    for c in range(1, C):
        m = jnp.maximum(m, x_ref[0, c].astype(jnp.float32))

    # Pass 2: stream exp + sum over channels, capturing the channel-1 numerator.
    # Exactly C exps per pixel (no recomputation of exp(x1 - m)).
    e1 = jnp.exp(x_ref[0, 1].astype(jnp.float32) - m)
    s = jnp.exp(x_ref[0, 0].astype(jnp.float32) - m) + e1
    for c in range(2, C):
        s = s + jnp.exp(x_ref[0, c].astype(jnp.float32) - m)

    # Normalize only the selected channel-1 plane; exact reciprocal keeps 1e-6 accuracy.
    o_ref[0] = (e1 * pl.reciprocal(s, approx=False)).astype(o_ref.dtype)


def _choose_tile_rows(num_rows, C, itemsize, rows_per_tile, n_batch, vmem_budget_bytes):
    """Pick rows-per-tile T so the double-buffered blocks fit a fixed VMEM budget."""
    # Sublane packing granularity: 8 for f32, 16 for bf16, 32 for int8/fp8.
    sub = max(_SUBLANE, 32 // max(int(itemsize), 1))
    # Per row of 128 lanes: double-buffered input (2*C), double-buffered output (2),
    # plus ~4 live f32 temporaries in the body (m, s, e1, current exp).
    per_row = (2 * C + 2) * _LANE * itemsize + 4 * _LANE * 4
    t_fit = max(sub, (vmem_budget_bytes // per_row) // sub * sub)
    T = max(sub, min(rows_per_tile, t_fit))
    # Keep >= ~8 total grid steps so both v7x TensorCores stay busy / pipeline fills.
    min_steps = 8
    if n_batch * _cdiv(num_rows, T) < min_steps and num_rows > sub:
        want_row_steps = _cdiv(min_steps, n_batch)
        T = min(T, max(sub, _round_up(_cdiv(num_rows, want_row_steps), sub)))
    if T >= num_rows:
        return num_rows  # full extent: no (8,128) divisibility requirement
    return T


def softmax_mask(x, *, rows_per_tile: int = 1024, vmem_budget_bytes: int = 16 * 1024 * 1024):
    """x: (N, C, H, W) -> (N, H, W): softmax over C, select channel 1."""
    N, C, H, W = x.shape
    assert C >= 2, "SoftmaxMask selects channel 1; needs C >= 2"

    HW = H * W
    itemsize = jnp.dtype(x.dtype).itemsize
    num_rows = _cdiv(HW, _LANE)
    hw_lane = num_rows * _LANE

    x2 = x.reshape(N, C, HW)
    if hw_lane != HW:
        # Minimal lane padding (<= 127 elements per (n, c)); only when H*W % 128 != 0.
        # Padded pixels compute softmax(0,...,0) = 1/C (finite) and are sliced off below.
        x2 = jnp.pad(x2, ((0, 0), (0, 0), (0, hw_lane - HW)))
    # Free metadata reshape when no padding was needed.
    x3 = x2.reshape(N, C, num_rows, _LANE)

    T = _choose_tile_rows(num_rows, C, itemsize, rows_per_tile, N, vmem_budget_bytes)
    grid = (N, _cdiv(num_rows, T))  # partial last rows-block handled by Pallas (masked stores)

    cost = pl.CostEstimate(
        flops=5 * N * C * HW,
        transcendentals=N * C * HW,
        bytes_accessed=N * HW * (C + 1) * itemsize,
    )

    out = pl.pallas_call(
        _softmax_mask_kernel,
        out_shape=jax.ShapeDtypeStruct((N, num_rows, _LANE), x.dtype),
        grid_spec=pltpu.PrefetchScalarGridSpec(
            num_scalar_prefetch=0,
            grid=grid,
            in_specs=[pl.BlockSpec((1, C, T, _LANE), lambda n, r: (n, 0, r, 0))],
            out_specs=pl.BlockSpec((1, T, _LANE), lambda n, r: (n, r, 0)),
        ),
        compiler_params=pltpu.CompilerParams(
            # Both grid axes are independent -> shard across TensorCores on megacore/v7x.
            dimension_semantics=("parallel", "parallel"),
            # Raise v5e's 16 MiB scoped default; safely inside v7x's 64 MiB physical VMEM.
            vmem_limit_bytes=32 * 1024 * 1024,
        ),
        cost_estimate=cost,
    )(x3)

    if hw_lane != HW:
        out = out.reshape(N, hw_lane)[:, :HW].reshape(N, H, W)
    else:
        out = out.reshape(N, H, W)
    return out


if __name__ == "__main__":
    key = jax.random.PRNGKey(0)

    # Case 1: the module's nominal small shape (H*W multiple of 128 -> zero pad/slice).
    N, C, H, W = 2, 4, 16, 16
    x = jax.random.normal(key, (N, C, H, W), dtype=jnp.float32)
    y = jax.block_until_ready(softmax_mask(x))
    ref = jax.nn.softmax(x, axis=1)[:, 1, :, :]
    assert y.shape == (N, H, W)
    assert jnp.allclose(y, ref, atol=1e-6, rtol=1e-6)

    # Case 2: H*W NOT a multiple of 128 (exercises the minimal lane pad + slice path).
    k2 = jax.random.fold_in(key, 1)
    x2 = jax.random.normal(k2, (2, 3, 7, 9), dtype=jnp.float32)
    y2 = jax.block_until_ready(softmax_mask(x2))
    ref2 = jax.nn.softmax(x2, axis=1)[:, 1, :, :]
    assert y2.shape == (2, 7, 9)
    assert jnp.allclose(y2, ref2, atol=1e-6, rtol=1e-6)

    # Case 3: partial last rows-block (num_rows=18 with T=8 -> last block covers 2 rows).
    k3 = jax.random.fold_in(key, 2)
    x3 = jax.random.normal(k3, (2, 4, 48, 48), dtype=jnp.float32)
    y3 = jax.block_until_ready(softmax_mask(x3, rows_per_tile=8))
    ref3 = jax.nn.softmax(x3, axis=1)[:, 1, :, :]
    assert y3.shape == (2, 48, 48)
    assert jnp.allclose(y3, ref3, atol=1e-6, rtol=1e-6)

    print("KERNEL_OK")
</pallas_src>

<mosaic_0001>
module attributes {stable_mosaic.version = 11 : i64} {
  func.func @_softmax_mask_kernel(%arg0: i32, %arg1: i32, %arg2: memref<1x4x2x128xf32, #tpu.memory_space<vmem>>, %arg3: memref<1x2x128xf32, #tpu.memory_space<vmem>>) attributes {dimension_semantics = [#tpu.dimension_semantics<parallel>, #tpu.dimension_semantics<parallel>], iteration_bounds = array<i64: 2, 1>, scalar_prefetch = 0 : i64, scratch_operands = 0 : i64, tpu.core_type = #tpu.core_type<tc>, window_params = [{transform_indices = @transform_0, window_bounds = array<i64: 1, 4, 2, 128>}, {transform_indices = @transform_1, window_bounds = array<i64: 1, 2, 128>}]} {
    %c0 = arith.constant 0 : index
    %c0_0 = arith.constant 0 : index
    %c0_1 = arith.constant 0 : index
    %c0_2 = arith.constant 0 : index
    %0 = vector.load %arg2[%c0, %c0_0, %c0_1, %c0_2] : memref<1x4x2x128xf32, #tpu.memory_space<vmem>>, vector<1x1x2x128xf32>
    %1 = vector.shape_cast %0 : vector<1x1x2x128xf32> to vector<2x128xf32>
    %c0_3 = arith.constant 0 : index
    %c1 = arith.constant 1 : index
    %c0_4 = arith.constant 0 : index
    %c0_5 = arith.constant 0 : index
    %2 = vector.load %arg2[%c0_3, %c1, %c0_4, %c0_5] : memref<1x4x2x128xf32, #tpu.memory_space<vmem>>, vector<1x1x2x128xf32>
    %3 = vector.shape_cast %2 : vector<1x1x2x128xf32> to vector<2x128xf32>
    %4 = arith.maximumf %1, %3 : vector<2x128xf32>
    %c0_6 = arith.constant 0 : index
    %c2 = arith.constant 2 : index
    %c0_7 = arith.constant 0 : index
    %c0_8 = arith.constant 0 : index
    %5 = vector.load %arg2[%c0_6, %c2, %c0_7, %c0_8] : memref<1x4x2x128xf32, #tpu.memory_space<vmem>>, vector<1x1x2x128xf32>
    %6 = vector.shape_cast %5 : vector<1x1x2x128xf32> to vector<2x128xf32>
    %7 = arith.maximumf %4, %6 : vector<2x128xf32>
    %c0_9 = arith.constant 0 : index
    %c3 = arith.constant 3 : index
    %c0_10 = arith.constant 0 : index
    %c0_11 = arith.constant 0 : index
    %8 = vector.load %arg2[%c0_9, %c3, %c0_10, %c0_11] : memref<1x4x2x128xf32, #tpu.memory_space<vmem>>, vector<1x1x2x128xf32>
    %9 = vector.shape_cast %8 : vector<1x1x2x128xf32> to vector<2x128xf32>
    %10 = arith.maximumf %7, %9 : vector<2x128xf32>
    %c0_12 = arith.constant 0 : index
    %c1_13 = arith.constant 1 : index
    %c0_14 = arith.constant 0 : index
    %c0_15 = arith.constant 0 : index
    %11 = vector.load %arg2[%c0_12, %c1_13, %c0_14, %c0_15] : memref<1x4x2x128xf32, #tpu.memory_space<vmem>>, vector<1x1x2x128xf32>
    %12 = vector.shape_cast %11 : vector<1x1x2x128xf32> to vector<2x128xf32>
    %13 = arith.subf %12, %10 : vector<2x128xf32>
    %14 = math.exp %13 : vector<2x128xf32>
    %c0_16 = arith.constant 0 : index
    %c0_17 = arith.constant 0 : index
    %c0_18 = arith.constant 0 : index
    %c0_19 = arith.constant 0 : index
    %15 = vector.load %arg2[%c0_16, %c0_17, %c0_18, %c0_19] : memref<1x4x2x128xf32, #tpu.memory_space<vmem>>, vector<1x1x2x128xf32>
    %16 = vector.shape_cast %15 : vector<1x1x2x128xf32> to vector<2x128xf32>
    %17 = arith.subf %16, %10 : vector<2x128xf32>
    %18 = math.exp %17 : vector<2x128xf32>
    %19 = arith.addf %18, %14 : vector<2x128xf32>
    %c0_20 = arith.constant 0 : index
    %c2_21 = arith.constant 2 : index
    %c0_22 = arith.constant 0 : index
    %c0_23 = arith.constant 0 : index
    %20 = vector.load %arg2[%c0_20, %c2_21, %c0_22, %c0_23] : memref<1x4x2x128xf32, #tpu.memory_space<vmem>>, vector<1x1x2x128xf32>
    %21 = vector.shape_cast %20 : vector<1x1x2x128xf32> to vector<2x128xf32>
    %22 = arith.subf %21, %10 : vector<2x128xf32>
    %23 = math.exp %22 : vector<2x128xf32>
    %24 = arith.addf %19, %23 : vector<2x128xf32>
    %c0_24 = arith.constant 0 : index
    %c3_25 = arith.constant 3 : index
    %c0_26 = arith.constant 0 : index
    %c0_27 = arith.constant 0 : index
    %25 = vector.load %arg2[%c0_24, %c3_25, %c0_26, %c0_27] : memref<1x4x2x128xf32, #tpu.memory_space<vmem>>, vector<1x1x2x128xf32>
    %26 = vector.shape_cast %25 : vector<1x1x2x128xf32> to vector<2x128xf32>
    %27 = arith.subf %26, %10 : vector<2x128xf32>
    %28 = math.exp %27 : vector<2x128xf32>
    %29 = arith.addf %24, %28 : vector<2x128xf32>
    %30 = tpu.reciprocal %29 : vector<2x128xf32> -> vector<2x128xf32>
    %31 = arith.mulf %14, %30 : vector<2x128xf32>
    %c0_28 = arith.constant 0 : index
    %c0_29 = arith.constant 0 : index
    %c0_30 = arith.constant 0 : index
    %32 = vector.load %arg3[%c0_28, %c0_29, %c0_30] : memref<1x2x128xf32, #tpu.memory_space<vmem>>, vector<1x2x128xf32>
    %33 = vector.shape_cast %32 : vector<1x2x128xf32> to vector<2x128xf32>
    %34 = vector.shape_cast %31 : vector<2x128xf32> to vector<1x2x128xf32>
    tpu.vector_store %arg3[%c0_28, %c0_29, %c0_30], %34 {strides = array<i32>} : memref<1x2x128xf32, #tpu.memory_space<vmem>>, vector<1x2x128xf32>,
    return
  }
  func.func @transform_0(%arg0: i32, %arg1: i32) -> (i32, i32, i32, i32) {
    %c0_i32 = arith.constant 0 : i32
    %c0_i32_0 = arith.constant 0 : i32
    %c0_i32_1 = arith.constant 0 : i32
    return %arg0, %c0_i32, %arg1, %c0_i32_0 : i32, i32, i32, i32
  }
  func.func @transform_1(%arg0: i32, %arg1: i32) -> (i32, i32, i32) {
    %c0_i32 = arith.constant 0 : i32
    %c0_i32_0 = arith.constant 0 : i32
    return %arg0, %arg1, %c0_i32 : i32, i32, i32
  }
}

</mosaic_0001>

<llo_original>
// kernel: tpu_custom_call.1
$region0: #{tpu_custom_call.1}
  #allocation0 [shape = 'u32[]', space=smem, size = 0x4, offset = 0x4, fixed_abs, tag = 'smem constant byte address 0x4 - core index']
  #allocation1 [shape = 'u32[144,128]{1,0:T(1,128)}', space=vmem, size = 0x12000, scoped, tag = 'internal scratch']
  %s0 = inlined_call_operand.hbm [shape: f32[2,4,2,128], index: 0, kind: input, shape index: {}]
  %s1 = inlined_call_operand.hbm [shape: f32[2,2,128], index: 1, kind: output, shape index: {}]
  %s2 = sld [smem:[#allocation0]]
  $region41: #{tpu_custom_call.1} parent=0
    _
  %s4 = ssub.s32 1, %s2
  %s5 = scalar_select 0, %s4, %s2
  $region1: #{tpu_custom_call.1} parent=0
    #allocation2 [shape = 'u8[8192]{0}', space=vmem, size = 0x2000, scoped, tag = 'input window, operand 0']
    #allocation3 [shape = 's32[2]{0}', space=sflag, size = 0x8, scoped, tag = 'scoped memory for tpu_custom_call.1']
    #allocation4 [shape = 's32[2]{0}', space=sflag, size = 0x8, scoped, tag = 'scoped memory for tpu_custom_call.1']
    #allocation5 [shape = 'u8[2048]{0}', space=vmem, size = 0x800, scoped, tag = 'output window, operand 0']
    %6 = vsyncpa [#allocation3], 0
    %s7 = scalar_lea.sflag [#allocation3], 1
    %8 = vsyncpa %s7, 0
    %9 = vsyncpa [#allocation4], 0
    %s10 = scalar_lea.sflag [#allocation4], 1
    %11 = vsyncpa %s10, 0
    loop: start=0, step=1, limit=4
    $region2: #{tpu_custom_call.1} parent=1 // loop_pre_header
      _
    $region3: #{tpu_custom_call.1} parent=1 // loop_header
      %s13 = sphi 0, %s17
      %p14 = scmp.ge.s32.totalorder %s13, 4
      %s20 = sphi 0, %s32
      %s21 = sphi 0, %s28
      %s22 = sphi 0, %s20
      %s23 = sphi 0, %s21
      %s24 = sphi 0, %s22
      %s25 = sphi 0, %s23
      %s37 = sphi 0, %s39
      %s40 = sphi 0, %s37
      %s41 = sphi 0, %s40
      %s57 = sphi 0, %s41
      %s65 = sphi 0, %s67
      %s68 = sphi 0, %s65
      %s69 = sphi 0, %s68
      %s85 = sphi 0, %s69
    $region4: #{tpu_custom_call.1} parent=1 // loop_header_branch
      %16 = sbr.rel (%p14) target = $region8
    $region5: #{tpu_custom_call.1} parent=1 // loop_body
      %s18 = ssub.s32 %s13, 1
      %s19 = ssub.s32 %s13, 2
      %s26 = sadd.s32 1, %s21
      %p27 = scmp.ge.s32.totalorder %s26, 1
      %s28 = scalar_select %p27, 0, %s26
      %s29 = sadd.s32 1, %s20
      %s30 = scalar_select %p27, %s29, %s20
      %p31 = scmp.ge.s32.totalorder %s30, 2
      %s32 = scalar_select %p31, 0, %s30
      %s33 = ssub.s32 %s20, %s32
      %s34 = ssub.s32 %s21, %s28
      %s35 = sor.u32 %s33, %s34
      %p36 = scmp.eq.s32.totalorder %s35, 0
      %s38 = sadd.s32 %s37, 1
      %s39 = scalar_select %p36, %s37, %s38
      %p42 = pneg %p36
      %p43 = scmp.eq.s32.totalorder %s13, 1
      %p44 = por %p42, %p43
      %p45 = scmp.ne.s32.totalorder %s37, %s40
      %p46 = scmp.eq.s32.totalorder %s13, 0
      %p47 = por %p45, %p46
      %p48 = scmp.ne.s32.totalorder %s37, %s40
      %p49 = scmp.eq.s32.totalorder %s18, 1
      %p50 = por %p48, %p49
      %p51 = scmp.ne.s32.totalorder %s40, %s41
      %p52 = scmp.eq.s32.totalorder %s18, 0
      %p53 = por %p51, %p52
      %p54 = scmp.ne.s32.totalorder %s40, %s41
      %p55 = scmp.eq.s32.totalorder %s19, 1
      %p56 = por %p54, %p55
      %p58 = scmp.ne.s32.totalorder %s41, %s57
      %p59 = scmp.eq.s32.totalorder %s19, 0
      %p60 = por %p58, %p59
      %s61 = ssub.s32 %s20, %s32
      %s62 = ssub.s32 %s21, %s28
      %s63 = sor.u32 %s61, %s62
      %p64 = scmp.eq.s32.totalorder %s63, 0
      %s66 = sadd.s32 %s65, 1
      %s67 = scalar_select %p64, %s65, %s66
      %p70 = pneg %p64
      %p71 = scmp.eq.s32.totalorder %s13, 1
      %p72 = por %p70, %p71
      %p73 = scmp.ne.s32.totalorder %s65, %s68
      %p74 = scmp.eq.s32.totalorder %s13, 0
      %p75 = por %p73, %p74
      %p76 = scmp.ne.s32.totalorder %s65, %s68
      %p77 = scmp.eq.s32.totalorder %s18, 1
      %p78 = por %p76, %p77
      %p79 = scmp.ne.s32.totalorder %s68, %s69
      %p80 = scmp.eq.s32.totalorder %s18, 0
      %p81 = por %p79, %p80
      %p82 = scmp.ne.s32.totalorder %s68, %s69
      %p83 = scmp.eq.s32.totalorder %s19, 1
      %p84 = por %p82, %p83
      %p86 = scmp.ne.s32.totalorder %s69, %s85
      %p87 = scmp.eq.s32.totalorder %s19, 0
      %p88 = por %p86, %p87
      %p89 = scmp.le.s32.totalorder 1, %s13
      %p90 = scmp.lt.s32.totalorder %s13, 3
      %p91 = pnand %p89, %p90
      %p92 = pneg %p91
      // Predicated region
      $region9: #{tpu_custom_call.1} parent=5 // pred_check
        _
      $region10: #{tpu_custom_call.1} parent=5 // pred_check_branch
        %94 = sbr.rel (%p91) target = $region12
      $region11: #{tpu_custom_call.1} parent=5 // pred_region
        %s95 = ssub.s32 %s13, 1
      $region12: #{tpu_custom_call.1} parent=5 // pred_fallthru
        _
      %p96 = scmp.lt.s32.totalorder %s13, 2
      // Predicated region
      $region13: #{tpu_custom_call.1} parent=5 // pred_check
        %p97 = pneg %p96
      $region14: #{tpu_custom_call.1} parent=5 // pred_check_branch
        %99 = sbr.rel (%p97) target = $region16
      $region15: #{tpu_custom_call.1} parent=5 // pred_region
        // Predicated region
        $region17: #{tpu_custom_call.1} parent=15 // pred_check
          %p100 = pneg %p47
        $region18: #{tpu_custom_call.1} parent=15 // pred_check_branch
          %102 = sbr.rel (%p100) target = $region20
        $region19: #{tpu_custom_call.1} parent=15 // pred_region
          %s103 = sand.u32 %s37, 1
          %s104 = scalar_lea.sflag [#allocation3], %s103
          %s105 = sand.u32 %s37, 1
          %s106 = smul.addr %s105, 8
          %s107 = scalar_lea.vmem [#allocation2], %s106
          %s109 = ssub.s32 128, 128
          %110 = vsyncadd %s104, %s109
          %s111 = smul.addr %s20, 4
          %s112 = sadd.s32 %s21, %s111
          %s113 = smul.addr %s112, 32
          %s114 = scalar_lea.hbm %s0, %s113
          %s115 = sshll.u32 %s107, 4
          %s116 = int_to_ptr.vmem [resolvable:$true] %s115
          %121 = dma.hbm_to_vmem [thread:$0]  %s114, 128, %s116, %s104, 32, 32, 2
        $region20: #{tpu_custom_call.1} parent=15 // pred_fallthru
          _
      $region16: #{tpu_custom_call.1} parent=5 // pred_fallthru
        _
      %p122 = scmp.le.s32.totalorder 1, %s13
      %p123 = scmp.lt.s32.totalorder %s13, 3
      %p124 = pnand %p122, %p123
      %p125 = pneg %p124
      // Predicated region
      $region21: #{tpu_custom_call.1} parent=5 // pred_check
        _
      $region22: #{tpu_custom_call.1} parent=5 // pred_check_branch
        %127 = sbr.rel (%p124) target = $region24
      $region23: #{tpu_custom_call.1} parent=5 // pred_region
        %s128 = ssub.s32 %s13, 1
        %s129 = sand.u32 %s40, 1
        %s130 = scalar_lea.sflag [#allocation3], %s129
        %s131 = sand.u32 %s40, 1
        %s132 = smul.addr %s131, 8
        %s133 = scalar_lea.vmem [#allocation2], %s132
        // Predicated region
        $region25: #{tpu_custom_call.1} parent=23 // pred_check
          %p134 = pneg %p53
        $region26: #{tpu_custom_call.1} parent=23 // pred_check_branch
          %136 = sbr.rel (%p134) target = $region28
        $region27: #{tpu_custom_call.1} parent=23 // pred_region
          %137 = dma.done %s130, 128
        $region28: #{tpu_custom_call.1} parent=23 // pred_fallthru
          _
        %s138 = sand.u32 %s40, 1
        %s139 = scalar_lea.sflag [#allocation3], %s138
        %s140 = sand.u32 %s40, 1
        %s141 = smul.addr %s140, 8
        %s142 = scalar_lea.vmem [#allocation2], %s141
        %p143 = pneg %p53
        %p144 = pneg %p50
        %p145 = pneg %p81
        %p146 = pneg %p78
        %s147 = sand.u32 %s68, 1
        %s148 = scalar_lea.sflag [#allocation4], %s147
        %s149 = sand.u32 %s68, 1
        %s150 = smul.addr %s149, 2
        %s151 = scalar_lea.vmem [#allocation5], %s150
        %v152 = vld [vmem:[%s133] sm:$0x3]
        %s153 = scalar_lea.vmem %s133, 2 [#allocation2]
        %v154 = vld [vmem:[%s153] sm:$0x3]
        %v155 = vmax.f32 %v152, %v154
        %s156 = scalar_lea.vmem %s133, 4 [#allocation2]
        %v157 = vld [vmem:[%s156] sm:$0x3]
        %v158 = vmax.f32 %v155, %v157
        %s159 = scalar_lea.vmem %s133, 6 [#allocation2]
        %v160 = vld [vmem:[%s159] sm:$0x3]
        %v161 = vmax.f32 %v158, %v160
        %v162 = vsub.f32 %v154, %v161
        %v163 = vmul.f32 %v162, 1.442695
        %v164 = vpow.pop %v163
        %v165 = vsub.f32 %v152, %v161
        %v166 = vmul.f32 %v165, 1.442695
        %v167 = vpow.pop %v166
        %v168 = vadd.f32 %v167, %v164
        %v169 = vsub.f32 %v157, %v161
        %v170 = vmul.f32 %v169, 1.442695
        %v171 = vpow.pop %v170
        %v172 = vadd.f32 %v168, %v171
        %v173 = vsub.f32 %v160, %v161
        %v174 = vmul.f32 %v173, 1.442695
        %v175 = vpow.pop %v174
        %v176 = vadd.f32 %v172, %v175
        %v177 = vrcp.pop %v176
        %v178 = vmul.f32 %v164, %v177
        %179 = vst [vmem:[%s151] sm:$0x3] %v178
        %s180 = sand.u32 %s68, 1
        %s181 = scalar_lea.sflag [#allocation4], %s180
        %s182 = sand.u32 %s68, 1
        %s183 = smul.addr %s182, 2
        %s184 = scalar_lea.vmem [#allocation5], %s183
        // Predicated region
        $region29: #{tpu_custom_call.1} parent=23 // pred_check
          %p185 = pneg %p78
        $region30: #{tpu_custom_call.1} parent=23 // pred_check_branch
          %187 = sbr.rel (%p185) target = $region32
        $region31: #{tpu_custom_call.1} parent=23 // pred_region
          %s189 = ssub.s32 32, 32
          %190 = vsyncadd %s181, %s189
          %s191 = sadd.s32 %s23, %s22
          %s192 = smul.addr %s191, 32
          %s193 = scalar_lea.hbm %s1, %s192
          %s195 = sshll.u32 %s184, 4
          %s196 = int_to_ptr.vmem [resolvable:$true] %s195
          %198 = dma.vmem_to_hbm [thread:$0]  %s196, 32, %s193, %s181
        $region32: #{tpu_custom_call.1} parent=23 // pred_fallthru
          _
      $region24: #{tpu_custom_call.1} parent=5 // pred_fallthru
        _
      %p199 = scmp.le.s32.totalorder 2, %s13
      // Predicated region
      $region33: #{tpu_custom_call.1} parent=5 // pred_check
        %p200 = pneg %p199
      $region34: #{tpu_custom_call.1} parent=5 // pred_check_branch
        %202 = sbr.rel (%p200) target = $region36
      $region35: #{tpu_custom_call.1} parent=5 // pred_region
        %s203 = ssub.s32 %s13, 2
        // Predicated region
        $region37: #{tpu_custom_call.1} parent=35 // pred_check
          %p204 = pneg %p84
        $region38: #{tpu_custom_call.1} parent=35 // pred_check_branch
          %206 = sbr.rel (%p204) target = $region40
        $region39: #{tpu_custom_call.1} parent=35 // pred_region
          %s207 = sand.u32 %s69, 1
          %s208 = scalar_lea.sflag [#allocation4], %s207
          %s209 = sand.u32 %s69, 1
          %s210 = smul.addr %s209, 2
          %s211 = scalar_lea.vmem [#allocation5], %s210
          %212 = dma.done %s208, 32
        $region40: #{tpu_custom_call.1} parent=35 // pred_fallthru
          _
      $region36: #{tpu_custom_call.1} parent=5 // pred_fallthru
        _
    $region6: #{tpu_custom_call.1} parent=1 // loop_footer
      %s17 = sadd.s32 1, %s13
    $region7: #{tpu_custom_call.1} parent=1 // loop_footer_branch
      %12 = sbr.rel target = $region3
    $region8: #{tpu_custom_call.1} parent=1 // loop_exit
      _
    %213 = vsyncpa [#allocation3], 1
    %s214 = scalar_lea.sflag [#allocation3], 1
    %215 = vsyncpa %s214, 1
    %216 = vsyncpa [#allocation4], 1
    %s217 = scalar_lea.sflag [#allocation4], 1
    %218 = vsyncpa %s217, 1

</llo_original>
